<compile_context>
chip_gen: v7x
topology: tpu7x:2x2x1
jax: 0.10.0
libtpu: 0.0.40
codegen_flags: <defaults>
</compile_context>

<pallas_src>
import functools

import jax
import jax.numpy as jnp
from jax.experimental import pallas as pl
from jax.experimental.pallas import tpu as pltpu


def _round_up(n: int, m: int) -> int:
    return ((n + m - 1) // m) * m


def _cdiv(a: int, b: int) -> int:
    return (a + b - 1) // b


def _vmem_capacity_bytes() -> int:
    try:
        return int(pltpu.get_tpu_info().vmem_capacity_bytes)
    except Exception:
        return 64 << 20  # conservative default: v7x per-TensorCore VMEM


def _single_buffer_supported() -> bool:
    # pl.Buffered(1) on a constant-index BlockSpec keeps a single resident copy
    # (halves weight VMEM vs. the default double-buffering).
    try:
        pl.BlockSpec((8, 128), lambda i: (0, 0), pipeline_mode=pl.Buffered(1))
        return True
    except Exception:
        return False


_SINGLE_BUF = _single_buffer_supported()


def _resident_spec(shape):
    index_map = lambda i: (0,) * len(shape)
    if _SINGLE_BUF:
        return pl.BlockSpec(shape, index_map, pipeline_mode=pl.Buffered(1))
    return pl.BlockSpec(shape, index_map)


def _pad2(a, rows, cols):
    pr, pc = rows - a.shape[0], cols - a.shape[1]
    if pr or pc:
        return jnp.pad(a, ((0, pr), (0, pc)))
    return a


# ------------------------------------------------------------------------
# Fully-resident fused plan (weights live in VMEM across all batch tiles).
# ------------------------------------------------------------------------
def _fused_mlp_kernel(x_ref, w1_ref, b1_ref, w2_ref, b2_ref, w3_ref, b3_ref,
                      o_ref, *, compute_dtype):
    cd = compute_dtype
    h = jnp.dot(x_ref[...], w1_ref[...],
                preferred_element_type=jnp.float32) + b1_ref[...]
    h = jnp.dot(h.astype(cd), w2_ref[...],
                preferred_element_type=jnp.float32) + b2_ref[...]
    h = jnp.dot(h.astype(cd), w3_ref[...],
                preferred_element_type=jnp.float32) + b3_ref[...]
    o_ref[...] = h.astype(o_ref.dtype)


def _fused_forward(xp, p, *, out_dtype, tb, vmem_cap):
    B8, Hp = xp.shape
    cd = p["w1"].dtype
    itemsize = jnp.dtype(cd).itemsize
    weight_copies = 1 if _SINGLE_BUF else 2

    vmem_bytes = (weight_copies * 3 * Hp * Hp * itemsize   # resident weights
                  + 6 * Hp * 4                             # biases (f32)
                  + 2 * tb * Hp * itemsize                 # double-buffered x tiles
                  + 2 * tb * Hp * 4                        # double-buffered out tiles
                  + 2 * tb * Hp * 4                        # live f32 intermediates
                  + (16 << 20))                            # headroom
    vmem_bytes = int(min(vmem_cap, max(vmem_bytes, 32 << 20)))

    kernel = functools.partial(_fused_mlp_kernel, compute_dtype=cd)
    return pl.pallas_call(
        kernel,
        out_shape=jax.ShapeDtypeStruct((B8, Hp), out_dtype),
        grid=(_cdiv(B8, tb),),
        in_specs=[
            pl.BlockSpec((tb, Hp), lambda i: (i, 0)),  # x: streamed per batch tile
            _resident_spec((Hp, Hp)),                  # w1: resident, single-buffered
            _resident_spec((1, Hp)),                   # b1
            _resident_spec((Hp, Hp)),                  # w2
            _resident_spec((1, Hp)),                   # b2
            _resident_spec((Hp, Hp)),                  # w3
            _resident_spec((1, Hp)),                   # b3
        ],
        out_specs=pl.BlockSpec((tb, Hp), lambda i: (i, 0)),
        compiler_params=pltpu.CompilerParams(
            dimension_semantics=("parallel",),         # batch tiles shard across TCs (v7x)
            vmem_limit_bytes=vmem_bytes,
        ),
    )(xp, p["w1"], p["b1"], p["w2"], p["b2"], p["w3"], p["b3"])


# ------------------------------------------------------------------------
# Streamed-weight fallback (per-layer K/N-tiled matmul) for large H / v7x VMEM.
# ------------------------------------------------------------------------
def _linear_kernel(x_ref, w_ref, b_ref, o_ref, acc_ref):
    k = pl.program_id(2)

    @pl.when(k == 0)
    def _():
        acc_ref[...] = jnp.zeros_like(acc_ref)

    acc_ref[...] += jnp.dot(x_ref[...], w_ref[...],
                            preferred_element_type=jnp.float32)

    @pl.when(k == pl.num_programs(2) - 1)
    def _():
        o_ref[...] = (acc_ref[...] + b_ref[...]).astype(o_ref.dtype)


def _linear_pallas(x, w, b, *, out_dtype, tb, tn, tk, vmem_cap):
    Bp, K = x.shape
    N = w.shape[1]
    x_item = jnp.dtype(x.dtype).itemsize
    w_item = jnp.dtype(w.dtype).itemsize
    o_item = jnp.dtype(out_dtype).itemsize
    vmem_bytes = (2 * tb * tk * x_item + 2 * tk * tn * w_item + 2 * tn * 4
                  + 2 * tb * tn * o_item + tb * tn * 4 + (16 << 20))
    vmem_bytes = int(min(vmem_cap, max(vmem_bytes, 32 << 20)))

    return pl.pallas_call(
        _linear_kernel,
        out_shape=jax.ShapeDtypeStruct((Bp, N), out_dtype),
        grid=(_cdiv(Bp, tb), _cdiv(N, tn), _cdiv(K, tk)),
        in_specs=[
            pl.BlockSpec((tb, tk), lambda i, j, k: (i, k)),
            pl.BlockSpec((tk, tn), lambda i, j, k: (k, j)),
            pl.BlockSpec((1, tn), lambda i, j, k: (0, j)),
        ],
        out_specs=pl.BlockSpec((tb, tn), lambda i, j, k: (i, j)),
        scratch_shapes=[pltpu.VMEM((tb, tn), jnp.float32)],
        compiler_params=pltpu.CompilerParams(
            dimension_semantics=("parallel", "parallel", "arbitrary"),
            vmem_limit_bytes=vmem_bytes,
        ),
    )(x, w, b)


def _divisor_tile(Hp: int, cap: int = 512) -> int:
    # Largest multiple of 128 <= cap that divides Hp (so K blocks are exact and
    # no garbage from a partial K block enters the accumulation).
    t = (min(cap, Hp) // 128) * 128
    while t > 128 and Hp % t:
        t -= 128
    return max(128, t)


def _streamed_forward(xp, p, *, out_dtype, tb, vmem_cap):
    cd = p["w1"].dtype
    t = _divisor_tile(p["w1"].shape[0], 512)
    lin = functools.partial(_linear_pallas, tb=tb, tn=t, tk=t, vmem_cap=vmem_cap)
    h = lin(xp, p["w1"], p["b1"], out_dtype=cd)
    h = lin(h, p["w2"], p["b2"], out_dtype=cd)
    return lin(h, p["w3"], p["b3"], out_dtype=out_dtype)


# ------------------------------------------------------------------------
# Public API
# ------------------------------------------------------------------------
def prepare_params(params, *, compute_dtype=jnp.bfloat16):
    """Pad weights to (Hp, Hp) lanes and cast ONCE (hoisted out of the per-call
    path).  Weights are (in, out); biases (1, H) or (H,).  Biases stay f32."""
    H = params["w1"].shape[0]
    Hp = _round_up(H, 128)
    out = {}
    for i in ("1", "2", "3"):
        out["w" + i] = _pad2(params["w" + i], Hp, Hp).astype(compute_dtype)
        out["b" + i] = _pad2(params["b" + i].reshape(1, -1), 1, Hp).astype(jnp.float32)
    return out


def _auto_batch_tile(B8, Hp, itemsize, vmem_cap):
    weight_copies = 1 if _SINGLE_BUF else 2
    resident = weight_copies * 3 * Hp * Hp * itemsize + 6 * Hp * 4
    per_row = Hp * (2 * itemsize + 2 * 4 + 2 * 4)   # x dbl-buf + out dbl-buf + f32 live
    leftover = int(0.70 * vmem_cap) - resident - (16 << 20)
    if leftover <= per_row * 256:
        tb = 256
    else:
        tb = min(1024, (leftover // per_row) // 256 * 256)
    # Keep >= 4 grid steps so each v7x TensorCore still pipelines >= 2 steps.
    if B8 >= 4 * 256:
        tb = min(tb, max(256, _round_up(_cdiv(B8, 4), 256)))
    tb = min(tb, B8)
    return max(8, (tb // 8) * 8)


def simple_mlp_forward(x, prepped, *, batch_tile=None, plan=None):
    """x: (B, H) float32.  prepped: output of prepare_params()."""
    B, H = x.shape
    out_dtype = x.dtype
    Hp = prepped["w1"].shape[0]
    assert Hp == _round_up(H, 128), "params were prepared for a different hidden size"
    cd = prepped["w1"].dtype
    itemsize = jnp.dtype(cd).itemsize

    B8 = _round_up(max(B, 8), 8)
    xp = _pad2(x, B8, Hp).astype(cd)   # stream x in the compute dtype (bf16 halves DMA bytes)

    vmem_cap = _vmem_capacity_bytes()
    if batch_tile is None:
        TB = _auto_batch_tile(B8, Hp, itemsize, vmem_cap)
    else:
        TB = max(8, min(_round_up(batch_tile, 8), B8))

    if plan is None:
        weight_copies = 1 if _SINGLE_BUF else 2
        resident_bytes = (weight_copies * 3 * Hp * Hp * itemsize + 6 * Hp * 4
                          + 256 * Hp * (2 * itemsize + 16))
        plan = "resident" if resident_bytes <= int(0.70 * vmem_cap) else "streamed"
        # TODO(synk): a further refinement would stream weight K/N tiles inside a
        # single fused kernel (pltpu.emit_pipeline) instead of per-layer calls.

    if plan == "resident":
        out = _fused_forward(xp, prepped, out_dtype=out_dtype, tb=TB, vmem_cap=vmem_cap)
    else:
        out = _streamed_forward(xp, prepped, out_dtype=out_dtype,
                                tb=min(TB, 512), vmem_cap=vmem_cap)
    return out[:B, :H]


def init_params(key, hidden_units):
    # Deterministic synthetic init mimicking nn.Linear's uniform(-1/sqrt(in), 1/sqrt(in)).
    bound = 1.0 / jnp.sqrt(jnp.float32(hidden_units))
    keys = jax.random.split(key, 6)

    def u(k, shape):
        return jax.random.uniform(k, shape, jnp.float32, minval=-bound, maxval=bound)

    return {
        "w1": u(keys[0], (hidden_units, hidden_units)),  # already (in, out)
        "b1": u(keys[1], (1, hidden_units)),
        "w2": u(keys[2], (hidden_units, hidden_units)),
        "b2": u(keys[3], (1, hidden_units)),
        "w3": u(keys[4], (hidden_units, hidden_units)),
        "b3": u(keys[5], (1, hidden_units)),
    }


def reference_forward(x, p):
    h = x @ p["w1"] + p["b1"]
    h = h @ p["w2"] + p["b2"]
    h = h @ p["w3"] + p["b3"]
    return h


if __name__ == "__main__":
    key = jax.random.PRNGKey(0)
    k = jax.random.split(key, 8)

    # 0) Module-default shape (hidden_units=2, batch=2): heavy lane/sublane padding, f32 path.
    x0 = jax.random.normal(k[0], (2, 2), jnp.float32)
    p0 = init_params(k[1], 2)
    prep0 = prepare_params(p0, compute_dtype=jnp.float32)
    out0 = jax.block_until_ready(simple_mlp_forward(x0, prep0))
    assert out0.shape == (2, 2)
    assert jnp.allclose(out0, reference_forward(x0, p0), atol=1e-5, rtol=1e-5)

    # 1) Small shape (batch=8, hidden=32), bit-faithful f32 path.
    x1 = jax.random.normal(k[2], (8, 32), jnp.float32)
    p1 = init_params(k[3], 32)
    prep1 = prepare_params(p1, compute_dtype=jnp.float32)
    out1 = jax.block_until_ready(simple_mlp_forward(x1, prep1))
    assert out1.shape == (8, 32)
    assert jnp.allclose(out1, reference_forward(x1, p1), atol=1e-5, rtol=1e-5)

    # 2) Default bf16 MXU path under jit, awkward batch (520 = 2*256 + 8) with an
    #    explicit 256-row tile: exercises the cdiv grid + masked partial last tile.
    x2 = jax.random.normal(k[4], (520, 256), jnp.float32)
    p2 = init_params(k[5], 256)
    prep2 = prepare_params(p2)                      # bf16 default
    fwd2 = jax.jit(functools.partial(simple_mlp_forward, batch_tile=256))
    out2 = jax.block_until_ready(fwd2(x2, prep2))
    ref2 = reference_forward(x2, p2)
    assert out2.shape == (520, 256)
    rel2 = jnp.max(jnp.abs(out2 - ref2)) / (jnp.max(jnp.abs(ref2)) + 1e-6)
    assert rel2 < 5e-2                               # bf16 quantization tolerance

    # 3) Forced streamed-weight fallback (plan used when resident weights don't
    #    fit VMEM, e.g. very large H on v7x); f32 for a tight numeric check.
    x3 = jax.random.normal(k[6], (64, 768), jnp.float32)
    p3 = init_params(k[7], 768)
    prep3 = prepare_params(p3, compute_dtype=jnp.float32)
    out3 = jax.block_until_ready(simple_mlp_forward(x3, prep3, plan="streamed"))
    ref3 = reference_forward(x3, p3)
    assert out3.shape == (64, 768)
    rel3 = jnp.max(jnp.abs(out3 - ref3)) / (jnp.max(jnp.abs(ref3)) + 1e-6)
    assert rel3 < 1e-2

    print("KERNEL_OK")
</pallas_src>

<mosaic_0001>
module attributes {stable_mosaic.version = 11 : i64} {
  func.func @_fused_mlp_kernel(%arg0: i32, %arg1: memref<8x128xf32, #tpu.memory_space<vmem>>, %arg2: memref<128x128xf32, #tpu.memory_space<vmem>>, %arg3: memref<1x128xf32, #tpu.memory_space<vmem>>, %arg4: memref<128x128xf32, #tpu.memory_space<vmem>>, %arg5: memref<1x128xf32, #tpu.memory_space<vmem>>, %arg6: memref<128x128xf32, #tpu.memory_space<vmem>>, %arg7: memref<1x128xf32, #tpu.memory_space<vmem>>, %arg8: memref<8x128xf32, #tpu.memory_space<vmem>>) attributes {dimension_semantics = [#tpu.dimension_semantics<parallel>], iteration_bounds = array<i64: 1>, scalar_prefetch = 0 : i64, scratch_operands = 0 : i64, tpu.core_type = #tpu.core_type<tc>, window_params = [{transform_indices = @transform_0, window_bounds = array<i64: 8, 128>}, {pipeline_mode = #tpu.pipeline_mode<synchronous>, transform_indices = @transform_1, window_bounds = array<i64: 128, 128>}, {pipeline_mode = #tpu.pipeline_mode<synchronous>, transform_indices = @transform_2, window_bounds = array<i64: 1, 128>}, {pipeline_mode = #tpu.pipeline_mode<synchronous>, transform_indices = @transform_3, window_bounds = array<i64: 128, 128>}, {pipeline_mode = #tpu.pipeline_mode<synchronous>, transform_indices = @transform_4, window_bounds = array<i64: 1, 128>}, {pipeline_mode = #tpu.pipeline_mode<synchronous>, transform_indices = @transform_5, window_bounds = array<i64: 128, 128>}, {pipeline_mode = #tpu.pipeline_mode<synchronous>, transform_indices = @transform_6, window_bounds = array<i64: 1, 128>}, {transform_indices = @transform_7, window_bounds = array<i64: 8, 128>}]} {
    %c0 = arith.constant 0 : index
    %c0_0 = arith.constant 0 : index
    %0 = vector.load %arg1[%c0, %c0_0] : memref<8x128xf32, #tpu.memory_space<vmem>>, vector<8x128xf32>
    %c0_1 = arith.constant 0 : index
    %c0_2 = arith.constant 0 : index
    %1 = vector.load %arg2[%c0_1, %c0_2] : memref<128x128xf32, #tpu.memory_space<vmem>>, vector<128x128xf32>
    %cst = arith.constant dense<0.000000e+00> : vector<8x128xf32>
    %2 = tpu.matmul %0, %1, %cst {dimension_numbers = #tpu.dot_dimension_numbers<[1], [0], [0], [1], [0, 0, 1, 1], [], []>} : vector<8x128xf32>, vector<128x128xf32>, vector<8x128xf32> -> vector<8x128xf32>
    %c0_3 = arith.constant 0 : index
    %c0_4 = arith.constant 0 : index
    %3 = vector.load %arg3[%c0_3, %c0_4] : memref<1x128xf32, #tpu.memory_space<vmem>>, vector<1x128xf32>
    %4 = vector.broadcast %3 : vector<1x128xf32> to vector<8x128xf32>
    %5 = arith.addf %2, %4 : vector<8x128xf32>
    %c0_5 = arith.constant 0 : index
    %c0_6 = arith.constant 0 : index
    %6 = vector.load %arg4[%c0_5, %c0_6] : memref<128x128xf32, #tpu.memory_space<vmem>>, vector<128x128xf32>
    %cst_7 = arith.constant dense<0.000000e+00> : vector<8x128xf32>
    %7 = tpu.matmul %5, %6, %cst_7 {dimension_numbers = #tpu.dot_dimension_numbers<[1], [0], [0], [1], [0, 0, 1, 1], [], []>} : vector<8x128xf32>, vector<128x128xf32>, vector<8x128xf32> -> vector<8x128xf32>
    %c0_8 = arith.constant 0 : index
    %c0_9 = arith.constant 0 : index
    %8 = vector.load %arg5[%c0_8, %c0_9] : memref<1x128xf32, #tpu.memory_space<vmem>>, vector<1x128xf32>
    %9 = vector.broadcast %8 : vector<1x128xf32> to vector<8x128xf32>
    %10 = arith.addf %7, %9 : vector<8x128xf32>
    %c0_10 = arith.constant 0 : index
    %c0_11 = arith.constant 0 : index
    %11 = vector.load %arg6[%c0_10, %c0_11] : memref<128x128xf32, #tpu.memory_space<vmem>>, vector<128x128xf32>
    %cst_12 = arith.constant dense<0.000000e+00> : vector<8x128xf32>
    %12 = tpu.matmul %10, %11, %cst_12 {dimension_numbers = #tpu.dot_dimension_numbers<[1], [0], [0], [1], [0, 0, 1, 1], [], []>} : vector<8x128xf32>, vector<128x128xf32>, vector<8x128xf32> -> vector<8x128xf32>
    %c0_13 = arith.constant 0 : index
    %c0_14 = arith.constant 0 : index
    %13 = vector.load %arg7[%c0_13, %c0_14] : memref<1x128xf32, #tpu.memory_space<vmem>>, vector<1x128xf32>
    %14 = vector.broadcast %13 : vector<1x128xf32> to vector<8x128xf32>
    %15 = arith.addf %12, %14 : vector<8x128xf32>
    %c0_15 = arith.constant 0 : index
    %c0_16 = arith.constant 0 : index
    %16 = vector.load %arg8[%c0_15, %c0_16] : memref<8x128xf32, #tpu.memory_space<vmem>>, vector<8x128xf32>
    tpu.vector_store %arg8[%c0_15, %c0_16], %15 {strides = array<i32>} : memref<8x128xf32, #tpu.memory_space<vmem>>, vector<8x128xf32>,
    return
  }
  func.func @transform_0(%arg0: i32) -> (i32, i32) {
    %c0_i32 = arith.constant 0 : i32
    %c0_i32_0 = arith.constant 0 : i32
    return %arg0, %c0_i32 : i32, i32
  }
  func.func @transform_1(%arg0: i32) -> (i32, i32) {
    %c0_i32 = arith.constant 0 : i32
    %c0_i32_0 = arith.constant 0 : i32
    %c0_i32_1 = arith.constant 0 : i32
    return %c0_i32, %c0_i32_0 : i32, i32
  }
  func.func @transform_2(%arg0: i32) -> (i32, i32) {
    %c0_i32 = arith.constant 0 : i32
    %c0_i32_0 = arith.constant 0 : i32
    %c0_i32_1 = arith.constant 0 : i32
    return %c0_i32, %c0_i32_0 : i32, i32
  }
  func.func @transform_3(%arg0: i32) -> (i32, i32) {
    %c0_i32 = arith.constant 0 : i32
    %c0_i32_0 = arith.constant 0 : i32
    %c0_i32_1 = arith.constant 0 : i32
    return %c0_i32, %c0_i32_0 : i32, i32
  }
  func.func @transform_4(%arg0: i32) -> (i32, i32) {
    %c0_i32 = arith.constant 0 : i32
    %c0_i32_0 = arith.constant 0 : i32
    %c0_i32_1 = arith.constant 0 : i32
    return %c0_i32, %c0_i32_0 : i32, i32
  }
  func.func @transform_5(%arg0: i32) -> (i32, i32) {
    %c0_i32 = arith.constant 0 : i32
    %c0_i32_0 = arith.constant 0 : i32
    %c0_i32_1 = arith.constant 0 : i32
    return %c0_i32, %c0_i32_0 : i32, i32
  }
  func.func @transform_6(%arg0: i32) -> (i32, i32) {
    %c0_i32 = arith.constant 0 : i32
    %c0_i32_0 = arith.constant 0 : i32
    %c0_i32_1 = arith.constant 0 : i32
    return %c0_i32, %c0_i32_0 : i32, i32
  }
  func.func @transform_7(%arg0: i32) -> (i32, i32) {
    %c0_i32 = arith.constant 0 : i32
    %c0_i32_0 = arith.constant 0 : i32
    return %arg0, %c0_i32 : i32, i32
  }
}

</mosaic_0001>

<llo_original>
// kernel: tpu_custom_call.1
$region0: #{tpu_custom_call.1}
  #allocation0 [shape = 'u32[]', space=smem, size = 0x4, offset = 0x4, fixed_abs, tag = 'smem constant byte address 0x4 - core index']
  #allocation1 [shape = 'u32[144,128]{1,0:T(1,128)}', space=vmem, size = 0x12000, scoped, tag = 'internal scratch']
  %s0 = inlined_call_operand.hbm [shape: f32[8,128], index: 0, kind: input, shape index: {}]
  %s1 = inlined_call_operand.hbm [shape: f32[128,128], index: 1, kind: input, shape index: {}]
  %s2 = inlined_call_operand.vmem [shape: f32[1,128], index: 2, kind: input, shape index: {}]
  %s3 = inlined_call_operand.hbm [shape: f32[128,128], index: 3, kind: input, shape index: {}]
  %s4 = inlined_call_operand.vmem [shape: f32[1,128], index: 4, kind: input, shape index: {}]
  %s5 = inlined_call_operand.hbm [shape: f32[128,128], index: 5, kind: input, shape index: {}]
  %s6 = inlined_call_operand.vmem [shape: f32[1,128], index: 6, kind: input, shape index: {}]
  %s7 = inlined_call_operand.hbm [shape: f32[8,128], index: 7, kind: output, shape index: {}]
  %s8 = sld [smem:[#allocation0]]
  $region54: #{tpu_custom_call.1} parent=0
    _
  %s10 = ssub.s32 1, %s8
  %s11 = scalar_select 0, %s10, %s8
  $region1: #{tpu_custom_call.1} parent=0
    #allocation2 [shape = 'u8[4096]{0}', space=vmem, size = 0x1000, scoped, tag = 'input window, operand 0, single buffered']
    #allocation3 [shape = 's32[1]{0}', space=sflag, size = 0x4, scoped, tag = 'scoped memory for tpu_custom_call.1']
    #allocation4 [shape = 's32[1]{0}', space=sflag, size = 0x4, scoped, tag = 'scoped memory for tpu_custom_call.1']
    #allocation5 [shape = 'u8[65536]{0}', space=vmem, size = 0x10000, scoped, tag = 'input window, operand 1, single buffered']
    #allocation6 [shape = 's32[1]{0}', space=sflag, size = 0x4, scoped, tag = 'scoped memory for tpu_custom_call.1']
    #allocation7 [shape = 'u8[65536]{0}', space=vmem, size = 0x10000, scoped, tag = 'input window, operand 3, single buffered']
    #allocation8 [shape = 'u8[65536]{0}', space=vmem, size = 0x10000, scoped, tag = 'input window, operand 5, single buffered']
    #allocation9 [shape = 's32[1]{0}', space=sflag, size = 0x4, scoped, tag = 'scoped memory for tpu_custom_call.1']
    #allocation10 [shape = 'u8[4096]{0}', space=vmem, size = 0x1000, scoped, tag = 'output window, operand 0, single buffered']
    %12 = vsyncpa [#allocation3], 0
    %13 = vsyncpa [#allocation6], 0
    %14 = vsyncpa [#allocation9], 0
    %15 = vsyncpa [#allocation4], 0
    // Predicated region
    $region2: #{tpu_custom_call.1} parent=1 // pred_check
      _
    $region3: #{tpu_custom_call.1} parent=1 // pred_check_branch
      %17 = sbr.rel (0) target = $region5
    $region4: #{tpu_custom_call.1} parent=1 // pred_region
      %s19 = ssub.s32 128, 128
      %20 = vsyncadd [#allocation3], %s19
      %s22 = sshll.u32 [#allocation2], 4
      %s23 = int_to_ptr.vmem [resolvable:$true] %s22
      %25 = dma.hbm_to_vmem [thread:$0]  %s0, 128, %s23, [#allocation3]
    $region5: #{tpu_custom_call.1} parent=1 // pred_fallthru
      _
    // Predicated region
    $region6: #{tpu_custom_call.1} parent=1 // pred_check
      _
    $region7: #{tpu_custom_call.1} parent=1 // pred_check_branch
      %27 = sbr.rel (0) target = $region9
    $region8: #{tpu_custom_call.1} parent=1 // pred_region
      %s29 = ssub.s32 2048, 2048
      %30 = vsyncadd [#allocation6], %s29
      %s31 = sshll.u32 [#allocation5], 4
      %s32 = int_to_ptr.vmem [resolvable:$true] %s31
      %37 = dma.hbm_to_vmem [thread:$0]  %s1, 2048, %s32, [#allocation6], 128, 128, 8
    $region9: #{tpu_custom_call.1} parent=1 // pred_fallthru
      _
    // Predicated region
    $region10: #{tpu_custom_call.1} parent=1 // pred_check
      _
    $region11: #{tpu_custom_call.1} parent=1 // pred_check_branch
      %39 = sbr.rel (0) target = $region13
    $region12: #{tpu_custom_call.1} parent=1 // pred_region
      _
    $region13: #{tpu_custom_call.1} parent=1 // pred_fallthru
      _
    // Predicated region
    $region14: #{tpu_custom_call.1} parent=1 // pred_check
      _
    $region15: #{tpu_custom_call.1} parent=1 // pred_check_branch
      %41 = sbr.rel (0) target = $region17
    $region16: #{tpu_custom_call.1} parent=1 // pred_region
      %s43 = ssub.s32 2048, 2048
      %44 = vsyncadd [#allocation6], %s43
      %s45 = sshll.u32 [#allocation7], 4
      %s46 = int_to_ptr.vmem [resolvable:$true] %s45
      %51 = dma.hbm_to_vmem [thread:$0]  %s3, 2048, %s46, [#allocation6], 128, 128, 8
    $region17: #{tpu_custom_call.1} parent=1 // pred_fallthru
      _
    // Predicated region
    $region18: #{tpu_custom_call.1} parent=1 // pred_check
      _
    $region19: #{tpu_custom_call.1} parent=1 // pred_check_branch
      %53 = sbr.rel (0) target = $region21
    $region20: #{tpu_custom_call.1} parent=1 // pred_region
      _
    $region21: #{tpu_custom_call.1} parent=1 // pred_fallthru
      _
    // Predicated region
    $region22: #{tpu_custom_call.1} parent=1 // pred_check
      _
    $region23: #{tpu_custom_call.1} parent=1 // pred_check_branch
      %55 = sbr.rel (0) target = $region25
    $region24: #{tpu_custom_call.1} parent=1 // pred_region
      %s57 = ssub.s32 2048, 2048
      %58 = vsyncadd [#allocation9], %s57
      %s59 = sshll.u32 [#allocation8], 4
      %s60 = int_to_ptr.vmem [resolvable:$true] %s59
      %65 = dma.hbm_to_vmem [thread:$0]  %s5, 2048, %s60, [#allocation9], 128, 128, 8
    $region25: #{tpu_custom_call.1} parent=1 // pred_fallthru
      _
    // Predicated region
    $region26: #{tpu_custom_call.1} parent=1 // pred_check
      _
    $region27: #{tpu_custom_call.1} parent=1 // pred_check_branch
      %67 = sbr.rel (0) target = $region29
    $region28: #{tpu_custom_call.1} parent=1 // pred_region
      _
    $region29: #{tpu_custom_call.1} parent=1 // pred_fallthru
      _
    // Predicated region
    $region30: #{tpu_custom_call.1} parent=1 // pred_check
      _
    $region31: #{tpu_custom_call.1} parent=1 // pred_check_branch
      %69 = sbr.rel (0) target = $region33
    $region32: #{tpu_custom_call.1} parent=1 // pred_region
      %70 = dma.done [#allocation3], 128
    $region33: #{tpu_custom_call.1} parent=1 // pred_fallthru
      _
    // Predicated region
    $region34: #{tpu_custom_call.1} parent=1 // pred_check
      _
    $region35: #{tpu_custom_call.1} parent=1 // pred_check_branch
      %72 = sbr.rel (0) target = $region37
    $region36: #{tpu_custom_call.1} parent=1 // pred_region
      %73 = dma.done [#allocation6], 2048
    $region37: #{tpu_custom_call.1} parent=1 // pred_fallthru
      _
    // Predicated region
    $region38: #{tpu_custom_call.1} parent=1 // pred_check
      _
    $region39: #{tpu_custom_call.1} parent=1 // pred_check_branch
      %75 = sbr.rel (0) target = $region41
    $region40: #{tpu_custom_call.1} parent=1 // pred_region
      %76 = dma.done [#allocation6], 2048
    $region41: #{tpu_custom_call.1} parent=1 // pred_fallthru
      _
    // Predicated region
    $region42: #{tpu_custom_call.1} parent=1 // pred_check
      _
    $region43: #{tpu_custom_call.1} parent=1 // pred_check_branch
      %78 = sbr.rel (0) target = $region45
    $region44: #{tpu_custom_call.1} parent=1 // pred_region
      %79 = dma.done [#allocation9], 2048
    $region45: #{tpu_custom_call.1} parent=1 // pred_fallthru
      _
    %v80 = vld [vmem:[#allocation2] sm:$0xff]
    %v81 = vld [vmem:[#allocation5] sm:$0xff]
    %v82 = vld [vmem:[#allocation5 + $0x8] sm:$0xff]
    %v83 = vld [vmem:[#allocation5 + $0x10] sm:$0xff]
    %v84 = vld [vmem:[#allocation5 + $0x18] sm:$0xff]
    %v85 = vld [vmem:[#allocation5 + $0x20] sm:$0xff]
    %v86 = vld [vmem:[#allocation5 + $0x28] sm:$0xff]
    %v87 = vld [vmem:[#allocation5 + $0x30] sm:$0xff]
    %v88 = vld [vmem:[#allocation5 + $0x38] sm:$0xff]
    %v89 = vld [vmem:[#allocation5 + $0x40] sm:$0xff]
    %v90 = vld [vmem:[#allocation5 + $0x48] sm:$0xff]
    %v91 = vld [vmem:[#allocation5 + $0x50] sm:$0xff]
    %v92 = vld [vmem:[#allocation5 + $0x58] sm:$0xff]
    %v93 = vld [vmem:[#allocation5 + $0x60] sm:$0xff]
    %v94 = vld [vmem:[#allocation5 + $0x68] sm:$0xff]
    %v95 = vld [vmem:[#allocation5 + $0x70] sm:$0xff]
    %v96 = vld [vmem:[#allocation5 + $0x78] sm:$0xff]
    %v97 = vld [vmem:[%s2] sm:$0x1]
    %v99 = vlaneseq
    %v100 = vshrl.u32 %v99, 7
    %v101 = vsub.s32 0, %v100
    %v102 = vrot.slane %v97, %v101
    %104 = vmatprep.subr.mxu0 0.0
    %105 = vmatpush1.msra.mxu0 %v81
    %106 = vmatprep.subr.mxu0 0.0
    %107 = vmatpush1.msra.mxu0 %v82
    %108 = vmatprep.subr.mxu0 0.0
    %109 = vmatpush1.msra.mxu0 %v83
    %110 = vmatprep.subr.mxu0 0.0
    %111 = vmatpush1.msra.mxu0 %v84
    %112 = vmatprep.subr.mxu0 0.0
    %113 = vmatpush1.msra.mxu0 %v85
    %114 = vmatprep.subr.mxu0 0.0
    %115 = vmatpush1.msra.mxu0 %v86
    %116 = vmatprep.subr.mxu0 0.0
    %117 = vmatpush1.msra.mxu0 %v87
    %118 = vmatprep.subr.mxu0 0.0
    %119 = vmatpush1.msra.mxu0 %v88
    %120 = vmatprep.subr.mxu0 0.0
    %121 = vmatpush1.msra.mxu0 %v89
    %122 = vmatprep.subr.mxu0 0.0
    %123 = vmatpush1.msra.mxu0 %v90
    %124 = vmatprep.subr.mxu0 0.0
    %125 = vmatpush1.msra.mxu0 %v91
    %126 = vmatprep.subr.mxu0 0.0
    %127 = vmatpush1.msra.mxu0 %v92
    %128 = vmatprep.subr.mxu0 0.0
    %129 = vmatpush1.msra.mxu0 %v93
    %130 = vmatprep.subr.mxu0 0.0
    %131 = vmatpush1.msra.mxu0 %v94
    %132 = vmatprep.subr.mxu0 0.0
    %133 = vmatpush1.msra.mxu0 %v95
    %134 = vmatprep.subr.mxu0 0.0
    %135 = vmatpush1.msra.mxu0 %v96
    %136 = vmatprep.subr.mxu0 0.0
    %137 = vmatpush1.msra.mxu0 0.0
    %138 = vmatprep.subr.mxu0 0.0
    %139 = vmatpush1.msra.mxu0 0.0
    %140 = vmatprep.subr.mxu0 0.0
    %141 = vmatpush1.msra.mxu0 0.0
    %142 = vmatprep.subr.mxu0 0.0
    %143 = vmatpush1.msra.mxu0 0.0
    %144 = vmatprep.subr.mxu0 0.0
    %145 = vmatpush1.msra.mxu0 0.0
    %146 = vmatprep.subr.mxu0 0.0
    %147 = vmatpush1.msra.mxu0 0.0
    %148 = vmatprep.subr.mxu0 0.0
    %149 = vmatpush1.msra.mxu0 0.0
    %150 = vmatprep.subr.mxu0 0.0
    %151 = vmatpush1.msra.mxu0 0.0
    %152 = vmatprep.subr.mxu0 0.0
    %153 = vmatpush1.msra.mxu0 0.0
    %154 = vmatprep.subr.mxu0 0.0
    %155 = vmatpush1.msra.mxu0 0.0
    %156 = vmatprep.subr.mxu0 0.0
    %157 = vmatpush1.msra.mxu0 0.0
    %158 = vmatprep.subr.mxu0 0.0
    %159 = vmatpush1.msra.mxu0 0.0
    %160 = vmatprep.subr.mxu0 0.0
    %161 = vmatpush1.msra.mxu0 0.0
    %162 = vmatprep.subr.mxu0 0.0
    %163 = vmatpush1.msra.mxu0 0.0
    %164 = vmatprep.subr.mxu0 0.0
    %165 = vmatpush1.msra.mxu0 0.0
    %166 = vmatprep.subr.mxu0 0.0
    %167 = vmatpush1.msra.mxu0 0.0
    %168 = vmatprep.mubr.f32.mxu0 0.0
    %169 = vmatmul.mubr.f32.gmra.mrb[0].mxu0 %v80
    %v170 = vpop.f32.mrb[0].mxu0
    %v171 = vadd.f32 %v102, %v170
    %v172 = vpop.f32.mrb[0].mxu0
    %173 = vdwg.mxu0
    %v174 = vld [vmem:[#allocation7] sm:$0xff]
    %v175 = vld [vmem:[#allocation7 + $0x8] sm:$0xff]
    %v176 = vld [vmem:[#allocation7 + $0x10] sm:$0xff]
    %v177 = vld [vmem:[#allocation7 + $0x18] sm:$0xff]
    %v178 = vld [vmem:[#allocation7 + $0x20] sm:$0xff]
    %v179 = vld [vmem:[#allocation7 + $0x28] sm:$0xff]
    %v180 = vld [vmem:[#allocation7 + $0x30] sm:$0xff]
    %v181 = vld [vmem:[#allocation7 + $0x38] sm:$0xff]
    %v182 = vld [vmem:[#allocation7 + $0x40] sm:$0xff]
    %v183 = vld [vmem:[#allocation7 + $0x48] sm:$0xff]
    %v184 = vld [vmem:[#allocation7 + $0x50] sm:$0xff]
    %v185 = vld [vmem:[#allocation7 + $0x58] sm:$0xff]
    %v186 = vld [vmem:[#allocation7 + $0x60] sm:$0xff]
    %v187 = vld [vmem:[#allocation7 + $0x68] sm:$0xff]
    %v188 = vld [vmem:[#allocation7 + $0x70] sm:$0xff]
    %v189 = vld [vmem:[#allocation7 + $0x78] sm:$0xff]
    %v190 = vld [vmem:[%s4] sm:$0x1]
    %v192 = vlaneseq
    %v193 = vshrl.u32 %v192, 7
    %v194 = vsub.s32 0, %v193
    %v195 = vrot.slane %v190, %v194
    %197 = vmatprep.subr.mxu0 0.0
    %198 = vmatpush1.msra.mxu0 %v174
    %199 = vmatprep.subr.mxu0 0.0
    %200 = vmatpush1.msra.mxu0 %v175
    %201 = vmatprep.subr.mxu0 0.0
    %202 = vmatpush1.msra.mxu0 %v176
    %203 = vmatprep.subr.mxu0 0.0
    %204 = vmatpush1.msra.mxu0 %v177
    %205 = vmatprep.subr.mxu0 0.0
    %206 = vmatpush1.msra.mxu0 %v178
    %207 = vmatprep.subr.mxu0 0.0
    %208 = vmatpush1.msra.mxu0 %v179
    %209 = vmatprep.subr.mxu0 0.0
    %210 = vmatpush1.msra.mxu0 %v180
    %211 = vmatprep.subr.mxu0 0.0
    %212 = vmatpush1.msra.mxu0 %v181
    %213 = vmatprep.subr.mxu0 0.0
    %214 = vmatpush1.msra.mxu0 %v182
    %215 = vmatprep.subr.mxu0 0.0
    %216 = vmatpush1.msra.mxu0 %v183
    %217 = vmatprep.subr.mxu0 0.0
    %218 = vmatpush1.msra.mxu0 %v184
    %219 = vmatprep.subr.mxu0 0.0
    %220 = vmatpush1.msra.mxu0 %v185
    %221 = vmatprep.subr.mxu0 0.0
    %222 = vmatpush1.msra.mxu0 %v186
    %223 = vmatprep.subr.mxu0 0.0
    %224 = vmatpush1.msra.mxu0 %v187
    %225 = vmatprep.subr.mxu0 0.0
    %226 = vmatpush1.msra.mxu0 %v188
    %227 = vmatprep.subr.mxu0 0.0
    %228 = vmatpush1.msra.mxu0 %v189
    %229 = vmatprep.subr.mxu0 0.0
    %230 = vmatpush1.msra.mxu0 0.0
    %231 = vmatprep.subr.mxu0 0.0
    %232 = vmatpush1.msra.mxu0 0.0
    %233 = vmatprep.subr.mxu0 0.0
    %234 = vmatpush1.msra.mxu0 0.0
    %235 = vmatprep.subr.mxu0 0.0
    %236 = vmatpush1.msra.mxu0 0.0
    %237 = vmatprep.subr.mxu0 0.0
    %238 = vmatpush1.msra.mxu0 0.0
    %239 = vmatprep.subr.mxu0 0.0
    %240 = vmatpush1.msra.mxu0 0.0
    %241 = vmatprep.subr.mxu0 0.0
    %242 = vmatpush1.msra.mxu0 0.0
    %243 = vmatprep.subr.mxu0 0.0
    %244 = vmatpush1.msra.mxu0 0.0
    %245 = vmatprep.subr.mxu0 0.0
    %246 = vmatpush1.msra.mxu0 0.0
    %247 = vmatprep.subr.mxu0 0.0
    %248 = vmatpush1.msra.mxu0 0.0
    %249 = vmatprep.subr.mxu0 0.0
    %250 = vmatpush1.msra.mxu0 0.0
    %251 = vmatprep.subr.mxu0 0.0
    %252 = vmatpush1.msra.mxu0 0.0
    %253 = vmatprep.subr.mxu0 0.0
    %254 = vmatpush1.msra.mxu0 0.0
    %255 = vmatprep.subr.mxu0 0.0
    %256 = vmatpush1.msra.mxu0 0.0
    %257 = vmatprep.subr.mxu0 0.0
    %258 = vmatpush1.msra.mxu0 0.0
    %259 = vmatprep.subr.mxu0 0.0
    %260 = vmatpush1.msra.mxu0 0.0
    %261 = vmatprep.mubr.f32.mxu0 0.0
    %262 = vmatmul.mubr.f32.gmra.mrb[0].mxu0 %v171
    %v263 = vpop.f32.mrb[0].mxu0
    %v264 = vadd.f32 %v195, %v263
    %v265 = vpop.f32.mrb[0].mxu0
    %266 = vdwg.mxu0
    %v267 = vld [vmem:[#allocation8] sm:$0xff]
    %v268 = vld [vmem:[#allocation8 + $0x8] sm:$0xff]
    %v269 = vld [vmem:[#allocation8 + $0x10] sm:$0xff]
    %v270 = vld [vmem:[#allocation8 + $0x18] sm:$0xff]
    %v271 = vld [vmem:[#allocation8 + $0x20] sm:$0xff]
    %v272 = vld [vmem:[#allocation8 + $0x28] sm:$0xff]
    %v273 = vld [vmem:[#allocation8 + $0x30] sm:$0xff]
    %v274 = vld [vmem:[#allocation8 + $0x38] sm:$0xff]
    %v275 = vld [vmem:[#allocation8 + $0x40] sm:$0xff]
    %v276 = vld [vmem:[#allocation8 + $0x48] sm:$0xff]
    %v277 = vld [vmem:[#allocation8 + $0x50] sm:$0xff]
    %v278 = vld [vmem:[#allocation8 + $0x58] sm:$0xff]
    %v279 = vld [vmem:[#allocation8 + $0x60] sm:$0xff]
    %v280 = vld [vmem:[#allocation8 + $0x68] sm:$0xff]
    %v281 = vld [vmem:[#allocation8 + $0x70] sm:$0xff]
    %v282 = vld [vmem:[#allocation8 + $0x78] sm:$0xff]
    %v283 = vld [vmem:[%s6] sm:$0x1]
    %v285 = vlaneseq
    %v286 = vshrl.u32 %v285, 7
    %v287 = vsub.s32 0, %v286
    %v288 = vrot.slane %v283, %v287
    %290 = vmatprep.subr.mxu0 0.0
    %291 = vmatpush1.msra.mxu0 %v267
    %292 = vmatprep.subr.mxu0 0.0
    %293 = vmatpush1.msra.mxu0 %v268
    %294 = vmatprep.subr.mxu0 0.0
    %295 = vmatpush1.msra.mxu0 %v269
    %296 = vmatprep.subr.mxu0 0.0
    %297 = vmatpush1.msra.mxu0 %v270
    %298 = vmatprep.subr.mxu0 0.0
    %299 = vmatpush1.msra.mxu0 %v271
    %300 = vmatprep.subr.mxu0 0.0
    %301 = vmatpush1.msra.mxu0 %v272
    %302 = vmatprep.subr.mxu0 0.0
    %303 = vmatpush1.msra.mxu0 %v273
    %304 = vmatprep.subr.mxu0 0.0
    %305 = vmatpush1.msra.mxu0 %v274
    %306 = vmatprep.subr.mxu0 0.0
    %307 = vmatpush1.msra.mxu0 %v275
    %308 = vmatprep.subr.mxu0 0.0
    %309 = vmatpush1.msra.mxu0 %v276
    %310 = vmatprep.subr.mxu0 0.0
    %311 = vmatpush1.msra.mxu0 %v277
    %312 = vmatprep.subr.mxu0 0.0
    %313 = vmatpush1.msra.mxu0 %v278
    %314 = vmatprep.subr.mxu0 0.0
    %315 = vmatpush1.msra.mxu0 %v279
    %316 = vmatprep.subr.mxu0 0.0
    %317 = vmatpush1.msra.mxu0 %v280
    %318 = vmatprep.subr.mxu0 0.0
    %319 = vmatpush1.msra.mxu0 %v281
    %320 = vmatprep.subr.mxu0 0.0
    %321 = vmatpush1.msra.mxu0 %v282
    %322 = vmatprep.subr.mxu0 0.0
    %323 = vmatpush1.msra.mxu0 0.0
    %324 = vmatprep.subr.mxu0 0.0
    %325 = vmatpush1.msra.mxu0 0.0
    %326 = vmatprep.subr.mxu0 0.0
    %327 = vmatpush1.msra.mxu0 0.0
    %328 = vmatprep.subr.mxu0 0.0
    %329 = vmatpush1.msra.mxu0 0.0
    %330 = vmatprep.subr.mxu0 0.0
    %331 = vmatpush1.msra.mxu0 0.0
    %332 = vmatprep.subr.mxu0 0.0
    %333 = vmatpush1.msra.mxu0 0.0
    %334 = vmatprep.subr.mxu0 0.0
    %335 = vmatpush1.msra.mxu0 0.0
    %336 = vmatprep.subr.mxu0 0.0
    %337 = vmatpush1.msra.mxu0 0.0
    %338 = vmatprep.subr.mxu0 0.0
    %339 = vmatpush1.msra.mxu0 0.0
    %340 = vmatprep.subr.mxu0 0.0
    %341 = vmatpush1.msra.mxu0 0.0
    %342 = vmatprep.subr.mxu0 0.0
    %343 = vmatpush1.msra.mxu0 0.0
    %344 = vmatprep.subr.mxu0 0.0
    %345 = vmatpush1.msra.mxu0 0.0
    %346 = vmatprep.subr.mxu0 0.0
    %347 = vmatpush1.msra.mxu0 0.0
    %348 = vmatprep.subr.mxu0 0.0
    %349 = vmatpush1.msra.mxu0 0.0
    %350 = vmatprep.subr.mxu0 0.0
    %351 = vmatpush1.msra.mxu0 0.0
    %352 = vmatprep.subr.mxu0 0.0
    %353 = vmatpush1.msra.mxu0 0.0
    %354 = vmatprep.mubr.f32.mxu0 0.0
    %355 = vmatmul.mubr.f32.gmra.mrb[0].mxu0 %v264
    %v356 = vpop.f32.mrb[0].mxu0
    %v357 = vadd.f32 %v288, %v356
    %v358 = vpop.f32.mrb[0].mxu0
    %359 = vdwg.mxu0
    %360 = vst [vmem:[#allocation10] sm:$0xff] %v357
    // Predicated region
    $region46: #{tpu_custom_call.1} parent=1 // pred_check
      _
    $region47: #{tpu_custom_call.1} parent=1 // pred_check_branch
      %362 = sbr.rel (0) target = $region49
    $region48: #{tpu_custom_call.1} parent=1 // pred_region
      %s364 = ssub.s32 128, 128
      %365 = vsyncadd [#allocation4], %s364
      %s367 = sshll.u32 [#allocation10], 4
      %s368 = int_to_ptr.vmem [resolvable:$true] %s367
      %370 = dma.vmem_to_hbm [thread:$0]  %s368, 128, %s7, [#allocation4]
    $region49: #{tpu_custom_call.1} parent=1 // pred_fallthru
      _
    // Predicated region
    $region50: #{tpu_custom_call.1} parent=1 // pred_check
      _
    $region51: #{tpu_custom_call.1} parent=1 // pred_check_branch
      %372 = sbr.rel (0) target = $region53
    $region52: #{tpu_custom_call.1} parent=1 // pred_region
      %373 = dma.done [#allocation4], 128
    $region53: #{tpu_custom_call.1} parent=1 // pred_fallthru
      _
    %374 = vsyncpa [#allocation3], 1
    %375 = vsyncpa [#allocation6], 1
    %376 = vsyncpa [#allocation9], 1
    %377 = vsyncpa [#allocation4], 1

</llo_original>
